<compile_context>
chip_gen: v6e
topology: v6e:2x2x1
jax: 0.10.0
libtpu: 0.0.40
codegen_flags: <defaults>
</compile_context>

<pallas_src>
import jax
import jax.numpy as jnp
from jax.experimental import pallas as pl
from jax.experimental.pallas import tpu as pltpu


def _pick_tile(full, max_tile, align):
    """Largest tile <= max_tile that divides `full` and is a multiple of `align`.
    Falls back to the full extent (always a legal block shape)."""
    if full <= max_tile:
        return full
    for cand in range(max_tile, align - 1, -1):
        if cand % align == 0 and full % cand == 0:
            return cand
    return full


def _make_encoding_kernel(TT, TH):
    def kernel(ids_ref, tok_hbm, pos_ref, o_ref, gbuf, sems):
        # ids_ref : SMEM (B, T) int32 token ids (scalar prefetch)
        # tok_hbm : HBM ref (V, H) token-embedding table (manual gather)
        # pos_ref : VMEM (TT, TH) contiguous positional rows (auto-pipelined)
        # o_ref   : VMEM (TT, TH) output block (batch dim squeezed)
        # gbuf    : VMEM (TT, TH) scratch for gathered embedding rows
        # sems    : DMA semaphores, one per gathered row
        b = pl.program_id(0)
        t = pl.program_id(1)
        j = pl.program_id(2)
        col0 = j * TH
        if TH % 128 == 0:
            col0 = pl.multiple_of(col0, 128)

        # Issue TT concurrent row-gather DMAs (data-dependent row, static dest).
        for i in range(TT):
            tok = ids_ref[b, t * TT + i]
            pltpu.make_async_copy(
                tok_hbm.at[pl.ds(tok, 1), pl.ds(col0, TH)],
                gbuf.at[pl.ds(i, 1)],
                sems.at[i],
            ).start()
        # Wait for all of them (same shapes => same semaphore byte counts).
        for i in range(TT):
            pltpu.make_async_copy(
                tok_hbm.at[pl.ds(0, 1), pl.ds(col0, TH)],
                gbuf.at[pl.ds(i, 1)],
                sems.at[i],
            ).wait()

        # Full-tile, lane/sublane-dense add + store.
        o_ref[...] = (gbuf[...] + pos_ref[...]).astype(o_ref.dtype)

    return kernel


def encoding_forward(x, tok_table, pos_table, *, tt_max=64, th_max=2048):
    """Pallas equivalent of Encoding.forward.

    x:          (B, T) or (T,) int token ids
    tok_table:  (vocab_size, H) token-embedding weights (row 0 == padding row)
    pos_table:  (max_length, H) positional-embedding weights
    returns:    (B, T, H) = tok_table[x] + pos_table[arange(T)]
    """
    if x.ndim == 1:
        # Matches the PyTorch module exactly: x = x.reshape(-1, 1) (so T == 1
        # and every token gets position 0).
        x = x.reshape(-1, 1)
    B, T = x.shape
    V, H = tok_table.shape
    Tmax, H2 = pos_table.shape
    assert H == H2, "embedding and positional tables must share the hidden dim"
    assert T <= Tmax, "sequence length exceeds the positional table"

    # Clamp ids: TPU does not bounds-check the data-dependent gather.
    ids = jnp.clip(x.astype(jnp.int32), 0, V - 1)
    # Positions are arange(T) => just the first T (contiguous) rows of pos_table.
    pos_used = pos_table[:T]

    TT = _pick_tile(T, tt_max, 8)     # token (sublane) tile, multiple of 8 or T
    TH = _pick_tile(H, th_max, 128)   # hidden (lane) tile, multiple of 128 or H
    nT = T // TT
    nH = H // TH

    out_dtype = jnp.result_type(tok_table.dtype, pos_table.dtype)
    itemsize = jnp.dtype(out_dtype).itemsize

    cost = pl.CostEstimate(
        flops=B * T * H,                      # one add per output element
        transcendentals=0,
        bytes_accessed=3 * B * T * H * itemsize + B * T * 4,
    )

    # VMEM budget: gather scratch + double-buffered pos & out blocks (+ slack);
    # well under the v5e 16 MiB / v7x 32 MiB scoped limits for default tiles.
    block_bytes = TT * TH * itemsize
    vmem_limit = int(min(max(8 * block_bytes + (4 << 20), 16 << 20), 32 << 20))

    out = pl.pallas_call(
        _make_encoding_kernel(TT, TH),
        out_shape=jax.ShapeDtypeStruct((B, T, H), out_dtype),
        grid_spec=pltpu.PrefetchScalarGridSpec(
            num_scalar_prefetch=1,            # ids -> SMEM
            grid=(B, nT, nH),
            in_specs=[
                # Token table stays in HBM; rows are gathered manually.
                pl.BlockSpec(memory_space=pl.ANY),
                # Positional rows: plain contiguous blocked read.
                pl.BlockSpec((TT, TH), lambda b, t, j, ids: (t, j)),
            ],
            out_specs=pl.BlockSpec((None, TT, TH), lambda b, t, j, ids: (b, t, j)),
            scratch_shapes=[
                pltpu.VMEM((TT, TH), tok_table.dtype),
                pltpu.SemaphoreType.DMA((TT,)),
            ],
        ),
        compiler_params=pltpu.CompilerParams(
            dimension_semantics=("parallel", "parallel", "arbitrary"),
            vmem_limit_bytes=vmem_limit,
        ),
        cost_estimate=cost,
    )(ids, tok_table, pos_used)

    return out


if __name__ == "__main__":
    key = jax.random.PRNGKey(0)

    # Small shapes consistent with the module: batch=2, seq=8, hidden=128
    # (lane-dense), vocab=512, max context length=16.
    vocab_size, h_dim, max_length = 512, 128, 16
    batch, seq = 2, 8

    k1, k2, k3 = jax.random.split(key, 3)
    tok_table = jax.random.normal(k1, (vocab_size, h_dim), dtype=jnp.float32)
    tok_table = tok_table.at[0].set(0.0)   # padding_idx=0 -> zero row
    pos_table = jax.random.normal(k2, (max_length, h_dim), dtype=jnp.float32)
    x = jax.random.randint(k3, (batch, seq), 0, vocab_size, dtype=jnp.int32)

    y = jax.block_until_ready(encoding_forward(x, tok_table, pos_table))

    # Pure-JAX reference.
    ref = (jnp.take(tok_table, x, axis=0)
           + jnp.take(pos_table,
                      jnp.broadcast_to(jnp.arange(seq), (batch, seq)), axis=0))

    assert y.shape == (batch, seq, h_dim) and y.dtype == tok_table.dtype
    assert jnp.allclose(y, ref, atol=1e-6, rtol=1e-6)
    print("KERNEL_OK")
</pallas_src>

<mosaic_0001>
module attributes {stable_mosaic.version = 11 : i64} {
  func.func @kernel(%arg0: i32, %arg1: i32, %arg2: i32, %arg3: memref<2x8xi32, #tpu.memory_space<smem>>, %arg4: memref<512x128xf32, #tpu.memory_space<any>>, %arg5: memref<8x128xf32, #tpu.memory_space<vmem>>, %arg6: memref<1x8x128xf32, #tpu.memory_space<vmem>>, %arg7: memref<8x128xf32, #tpu.memory_space<vmem>>, %arg8: memref<8x!tpu.dma_semaphore, #tpu.memory_space<semaphore_mem>>) attributes {dimension_semantics = [#tpu.dimension_semantics<parallel>, #tpu.dimension_semantics<parallel>, #tpu.dimension_semantics<arbitrary>], iteration_bounds = array<i64: 2, 1, 1>, scalar_prefetch = 1 : i64, scratch_operands = 2 : i64, tpu.core_type = #tpu.core_type<tc>, window_params = [{}, {transform_indices = @transform_1, window_bounds = array<i64: 8, 128>}, {transform_indices = @transform_2, window_bounds = array<i64: 1, 8, 128>}]} {
    %c128_i32 = arith.constant 128 : i32
    %0 = arith.muli %arg2, %c128_i32 : i32
    %1 = tpu.assume_multiple %0, 128 : i32
    %c8_i32 = arith.constant 8 : i32
    %2 = arith.muli %arg1, %c8_i32 : i32
    %c0_i32 = arith.constant 0 : i32
    %3 = arith.addi %2, %c0_i32 : i32
    %4 = arith.index_cast %arg0 : i32 to index
    %5 = arith.index_cast %3 : i32 to index
    %6 = memref.load %arg3[%4, %5] : memref<2x8xi32, #tpu.memory_space<smem>>
    %c0_i32_0 = arith.constant 0 : i32
    %7 = tpu.memref_slice %arg4[%6, %1] : memref<512x128xf32, #tpu.memory_space<any>> -> memref<1x128xf32, #tpu.memory_space<any>>
    %c0_i32_1 = arith.constant 0 : i32
    %c0_i32_2 = arith.constant 0 : i32
    %8 = tpu.memref_slice %arg7[%c0_i32_1, %c0_i32_2] : memref<8x128xf32, #tpu.memory_space<vmem>> -> memref<1x128xf32, #tpu.memory_space<vmem>>
    %9 = tpu.memref_slice %arg8[%c0_i32_0] : memref<8x!tpu.dma_semaphore, #tpu.memory_space<semaphore_mem>> -> memref<1x!tpu.dma_semaphore, #tpu.memory_space<semaphore_mem>>
    %10 = tpu.memref_squeeze %9 : memref<1x!tpu.dma_semaphore, #tpu.memory_space<semaphore_mem>> -> memref<!tpu.dma_semaphore, #tpu.memory_space<semaphore_mem>>
    tpu.enqueue_dma source(%7 : memref<1x128xf32, #tpu.memory_space<any>>) target(%8 : memref<1x128xf32, #tpu.memory_space<vmem>>) target_semaphore(%10 : memref<!tpu.dma_semaphore, #tpu.memory_space<semaphore_mem>>)
    %c8_i32_3 = arith.constant 8 : i32
    %11 = arith.muli %arg1, %c8_i32_3 : i32
    %c1_i32 = arith.constant 1 : i32
    %12 = arith.addi %11, %c1_i32 : i32
    %13 = arith.index_cast %arg0 : i32 to index
    %14 = arith.index_cast %12 : i32 to index
    %15 = memref.load %arg3[%13, %14] : memref<2x8xi32, #tpu.memory_space<smem>>
    %c1_i32_4 = arith.constant 1 : i32
    %16 = tpu.memref_slice %arg4[%15, %1] : memref<512x128xf32, #tpu.memory_space<any>> -> memref<1x128xf32, #tpu.memory_space<any>>
    %c1_i32_5 = arith.constant 1 : i32
    %c0_i32_6 = arith.constant 0 : i32
    %17 = tpu.memref_slice %arg7[%c1_i32_5, %c0_i32_6] : memref<8x128xf32, #tpu.memory_space<vmem>> -> memref<1x128xf32, #tpu.memory_space<vmem>>
    %18 = tpu.memref_slice %arg8[%c1_i32_4] : memref<8x!tpu.dma_semaphore, #tpu.memory_space<semaphore_mem>> -> memref<1x!tpu.dma_semaphore, #tpu.memory_space<semaphore_mem>>
    %19 = tpu.memref_squeeze %18 : memref<1x!tpu.dma_semaphore, #tpu.memory_space<semaphore_mem>> -> memref<!tpu.dma_semaphore, #tpu.memory_space<semaphore_mem>>
    tpu.enqueue_dma source(%16 : memref<1x128xf32, #tpu.memory_space<any>>) target(%17 : memref<1x128xf32, #tpu.memory_space<vmem>>) target_semaphore(%19 : memref<!tpu.dma_semaphore, #tpu.memory_space<semaphore_mem>>)
    %c8_i32_7 = arith.constant 8 : i32
    %20 = arith.muli %arg1, %c8_i32_7 : i32
    %c2_i32 = arith.constant 2 : i32
    %21 = arith.addi %20, %c2_i32 : i32
    %22 = arith.index_cast %arg0 : i32 to index
    %23 = arith.index_cast %21 : i32 to index
    %24 = memref.load %arg3[%22, %23] : memref<2x8xi32, #tpu.memory_space<smem>>
    %c2_i32_8 = arith.constant 2 : i32
    %25 = tpu.memref_slice %arg4[%24, %1] : memref<512x128xf32, #tpu.memory_space<any>> -> memref<1x128xf32, #tpu.memory_space<any>>
    %c2_i32_9 = arith.constant 2 : i32
    %c0_i32_10 = arith.constant 0 : i32
    %26 = tpu.memref_slice %arg7[%c2_i32_9, %c0_i32_10] : memref<8x128xf32, #tpu.memory_space<vmem>> -> memref<1x128xf32, #tpu.memory_space<vmem>>
    %27 = tpu.memref_slice %arg8[%c2_i32_8] : memref<8x!tpu.dma_semaphore, #tpu.memory_space<semaphore_mem>> -> memref<1x!tpu.dma_semaphore, #tpu.memory_space<semaphore_mem>>
    %28 = tpu.memref_squeeze %27 : memref<1x!tpu.dma_semaphore, #tpu.memory_space<semaphore_mem>> -> memref<!tpu.dma_semaphore, #tpu.memory_space<semaphore_mem>>
    tpu.enqueue_dma source(%25 : memref<1x128xf32, #tpu.memory_space<any>>) target(%26 : memref<1x128xf32, #tpu.memory_space<vmem>>) target_semaphore(%28 : memref<!tpu.dma_semaphore, #tpu.memory_space<semaphore_mem>>)
    %c8_i32_11 = arith.constant 8 : i32
    %29 = arith.muli %arg1, %c8_i32_11 : i32
    %c3_i32 = arith.constant 3 : i32
    %30 = arith.addi %29, %c3_i32 : i32
    %31 = arith.index_cast %arg0 : i32 to index
    %32 = arith.index_cast %30 : i32 to index
    %33 = memref.load %arg3[%31, %32] : memref<2x8xi32, #tpu.memory_space<smem>>
    %c3_i32_12 = arith.constant 3 : i32
    %34 = tpu.memref_slice %arg4[%33, %1] : memref<512x128xf32, #tpu.memory_space<any>> -> memref<1x128xf32, #tpu.memory_space<any>>
    %c3_i32_13 = arith.constant 3 : i32
    %c0_i32_14 = arith.constant 0 : i32
    %35 = tpu.memref_slice %arg7[%c3_i32_13, %c0_i32_14] : memref<8x128xf32, #tpu.memory_space<vmem>> -> memref<1x128xf32, #tpu.memory_space<vmem>>
    %36 = tpu.memref_slice %arg8[%c3_i32_12] : memref<8x!tpu.dma_semaphore, #tpu.memory_space<semaphore_mem>> -> memref<1x!tpu.dma_semaphore, #tpu.memory_space<semaphore_mem>>
    %37 = tpu.memref_squeeze %36 : memref<1x!tpu.dma_semaphore, #tpu.memory_space<semaphore_mem>> -> memref<!tpu.dma_semaphore, #tpu.memory_space<semaphore_mem>>
    tpu.enqueue_dma source(%34 : memref<1x128xf32, #tpu.memory_space<any>>) target(%35 : memref<1x128xf32, #tpu.memory_space<vmem>>) target_semaphore(%37 : memref<!tpu.dma_semaphore, #tpu.memory_space<semaphore_mem>>)
    %c8_i32_15 = arith.constant 8 : i32
    %38 = arith.muli %arg1, %c8_i32_15 : i32
    %c4_i32 = arith.constant 4 : i32
    %39 = arith.addi %38, %c4_i32 : i32
    %40 = arith.index_cast %arg0 : i32 to index
    %41 = arith.index_cast %39 : i32 to index
    %42 = memref.load %arg3[%40, %41] : memref<2x8xi32, #tpu.memory_space<smem>>
    %c4_i32_16 = arith.constant 4 : i32
    %43 = tpu.memref_slice %arg4[%42, %1] : memref<512x128xf32, #tpu.memory_space<any>> -> memref<1x128xf32, #tpu.memory_space<any>>
    %c4_i32_17 = arith.constant 4 : i32
    %c0_i32_18 = arith.constant 0 : i32
    %44 = tpu.memref_slice %arg7[%c4_i32_17, %c0_i32_18] : memref<8x128xf32, #tpu.memory_space<vmem>> -> memref<1x128xf32, #tpu.memory_space<vmem>>
    %45 = tpu.memref_slice %arg8[%c4_i32_16] : memref<8x!tpu.dma_semaphore, #tpu.memory_space<semaphore_mem>> -> memref<1x!tpu.dma_semaphore, #tpu.memory_space<semaphore_mem>>
    %46 = tpu.memref_squeeze %45 : memref<1x!tpu.dma_semaphore, #tpu.memory_space<semaphore_mem>> -> memref<!tpu.dma_semaphore, #tpu.memory_space<semaphore_mem>>
    tpu.enqueue_dma source(%43 : memref<1x128xf32, #tpu.memory_space<any>>) target(%44 : memref<1x128xf32, #tpu.memory_space<vmem>>) target_semaphore(%46 : memref<!tpu.dma_semaphore, #tpu.memory_space<semaphore_mem>>)
    %c8_i32_19 = arith.constant 8 : i32
    %47 = arith.muli %arg1, %c8_i32_19 : i32
    %c5_i32 = arith.constant 5 : i32
    %48 = arith.addi %47, %c5_i32 : i32
    %49 = arith.index_cast %arg0 : i32 to index
    %50 = arith.index_cast %48 : i32 to index
    %51 = memref.load %arg3[%49, %50] : memref<2x8xi32, #tpu.memory_space<smem>>
    %c5_i32_20 = arith.constant 5 : i32
    %52 = tpu.memref_slice %arg4[%51, %1] : memref<512x128xf32, #tpu.memory_space<any>> -> memref<1x128xf32, #tpu.memory_space<any>>
    %c5_i32_21 = arith.constant 5 : i32
    %c0_i32_22 = arith.constant 0 : i32
    %53 = tpu.memref_slice %arg7[%c5_i32_21, %c0_i32_22] : memref<8x128xf32, #tpu.memory_space<vmem>> -> memref<1x128xf32, #tpu.memory_space<vmem>>
    %54 = tpu.memref_slice %arg8[%c5_i32_20] : memref<8x!tpu.dma_semaphore, #tpu.memory_space<semaphore_mem>> -> memref<1x!tpu.dma_semaphore, #tpu.memory_space<semaphore_mem>>
    %55 = tpu.memref_squeeze %54 : memref<1x!tpu.dma_semaphore, #tpu.memory_space<semaphore_mem>> -> memref<!tpu.dma_semaphore, #tpu.memory_space<semaphore_mem>>
    tpu.enqueue_dma source(%52 : memref<1x128xf32, #tpu.memory_space<any>>) target(%53 : memref<1x128xf32, #tpu.memory_space<vmem>>) target_semaphore(%55 : memref<!tpu.dma_semaphore, #tpu.memory_space<semaphore_mem>>)
    %c8_i32_23 = arith.constant 8 : i32
    %56 = arith.muli %arg1, %c8_i32_23 : i32
    %c6_i32 = arith.constant 6 : i32
    %57 = arith.addi %56, %c6_i32 : i32
    %58 = arith.index_cast %arg0 : i32 to index
    %59 = arith.index_cast %57 : i32 to index
    %60 = memref.load %arg3[%58, %59] : memref<2x8xi32, #tpu.memory_space<smem>>
    %c6_i32_24 = arith.constant 6 : i32
    %61 = tpu.memref_slice %arg4[%60, %1] : memref<512x128xf32, #tpu.memory_space<any>> -> memref<1x128xf32, #tpu.memory_space<any>>
    %c6_i32_25 = arith.constant 6 : i32
    %c0_i32_26 = arith.constant 0 : i32
    %62 = tpu.memref_slice %arg7[%c6_i32_25, %c0_i32_26] : memref<8x128xf32, #tpu.memory_space<vmem>> -> memref<1x128xf32, #tpu.memory_space<vmem>>
    %63 = tpu.memref_slice %arg8[%c6_i32_24] : memref<8x!tpu.dma_semaphore, #tpu.memory_space<semaphore_mem>> -> memref<1x!tpu.dma_semaphore, #tpu.memory_space<semaphore_mem>>
    %64 = tpu.memref_squeeze %63 : memref<1x!tpu.dma_semaphore, #tpu.memory_space<semaphore_mem>> -> memref<!tpu.dma_semaphore, #tpu.memory_space<semaphore_mem>>
    tpu.enqueue_dma source(%61 : memref<1x128xf32, #tpu.memory_space<any>>) target(%62 : memref<1x128xf32, #tpu.memory_space<vmem>>) target_semaphore(%64 : memref<!tpu.dma_semaphore, #tpu.memory_space<semaphore_mem>>)
    %c8_i32_27 = arith.constant 8 : i32
    %65 = arith.muli %arg1, %c8_i32_27 : i32
    %c7_i32 = arith.constant 7 : i32
    %66 = arith.addi %65, %c7_i32 : i32
    %67 = arith.index_cast %arg0 : i32 to index
    %68 = arith.index_cast %66 : i32 to index
    %69 = memref.load %arg3[%67, %68] : memref<2x8xi32, #tpu.memory_space<smem>>
    %c7_i32_28 = arith.constant 7 : i32
    %70 = tpu.memref_slice %arg4[%69, %1] : memref<512x128xf32, #tpu.memory_space<any>> -> memref<1x128xf32, #tpu.memory_space<any>>
    %c7_i32_29 = arith.constant 7 : i32
    %c0_i32_30 = arith.constant 0 : i32
    %71 = tpu.memref_slice %arg7[%c7_i32_29, %c0_i32_30] : memref<8x128xf32, #tpu.memory_space<vmem>> -> memref<1x128xf32, #tpu.memory_space<vmem>>
    %72 = tpu.memref_slice %arg8[%c7_i32_28] : memref<8x!tpu.dma_semaphore, #tpu.memory_space<semaphore_mem>> -> memref<1x!tpu.dma_semaphore, #tpu.memory_space<semaphore_mem>>
    %73 = tpu.memref_squeeze %72 : memref<1x!tpu.dma_semaphore, #tpu.memory_space<semaphore_mem>> -> memref<!tpu.dma_semaphore, #tpu.memory_space<semaphore_mem>>
    tpu.enqueue_dma source(%70 : memref<1x128xf32, #tpu.memory_space<any>>) target(%71 : memref<1x128xf32, #tpu.memory_space<vmem>>) target_semaphore(%73 : memref<!tpu.dma_semaphore, #tpu.memory_space<semaphore_mem>>)
    %c0_i32_31 = arith.constant 0 : i32
    %c0_i32_32 = arith.constant 0 : i32
    %74 = tpu.memref_slice %arg4[%c0_i32_32, %1] : memref<512x128xf32, #tpu.memory_space<any>> -> memref<1x128xf32, #tpu.memory_space<any>>
    %c0_i32_33 = arith.constant 0 : i32
    %c0_i32_34 = arith.constant 0 : i32
    %75 = tpu.memref_slice %arg7[%c0_i32_33, %c0_i32_34] : memref<8x128xf32, #tpu.memory_space<vmem>> -> memref<1x128xf32, #tpu.memory_space<vmem>>
    %76 = tpu.memref_slice %arg8[%c0_i32_31] : memref<8x!tpu.dma_semaphore, #tpu.memory_space<semaphore_mem>> -> memref<1x!tpu.dma_semaphore, #tpu.memory_space<semaphore_mem>>
    %77 = tpu.memref_squeeze %76 : memref<1x!tpu.dma_semaphore, #tpu.memory_space<semaphore_mem>> -> memref<!tpu.dma_semaphore, #tpu.memory_space<semaphore_mem>>
    tpu.wait_dma2 semaphore(%77 : memref<!tpu.dma_semaphore, #tpu.memory_space<semaphore_mem>>) src(%74 : memref<1x128xf32, #tpu.memory_space<any>>) dst(%75 : memref<1x128xf32, #tpu.memory_space<vmem>>)
    %c1_i32_35 = arith.constant 1 : i32
    %c0_i32_36 = arith.constant 0 : i32
    %78 = tpu.memref_slice %arg4[%c0_i32_36, %1] : memref<512x128xf32, #tpu.memory_space<any>> -> memref<1x128xf32, #tpu.memory_space<any>>
    %c1_i32_37 = arith.constant 1 : i32
    %c0_i32_38 = arith.constant 0 : i32
    %79 = tpu.memref_slice %arg7[%c1_i32_37, %c0_i32_38] : memref<8x128xf32, #tpu.memory_space<vmem>> -> memref<1x128xf32, #tpu.memory_space<vmem>>
    %80 = tpu.memref_slice %arg8[%c1_i32_35] : memref<8x!tpu.dma_semaphore, #tpu.memory_space<semaphore_mem>> -> memref<1x!tpu.dma_semaphore, #tpu.memory_space<semaphore_mem>>
    %81 = tpu.memref_squeeze %80 : memref<1x!tpu.dma_semaphore, #tpu.memory_space<semaphore_mem>> -> memref<!tpu.dma_semaphore, #tpu.memory_space<semaphore_mem>>
    tpu.wait_dma2 semaphore(%81 : memref<!tpu.dma_semaphore, #tpu.memory_space<semaphore_mem>>) src(%78 : memref<1x128xf32, #tpu.memory_space<any>>) dst(%79 : memref<1x128xf32, #tpu.memory_space<vmem>>)
    %c2_i32_39 = arith.constant 2 : i32
    %c0_i32_40 = arith.constant 0 : i32
    %82 = tpu.memref_slice %arg4[%c0_i32_40, %1] : memref<512x128xf32, #tpu.memory_space<any>> -> memref<1x128xf32, #tpu.memory_space<any>>
    %c2_i32_41 = arith.constant 2 : i32
    %c0_i32_42 = arith.constant 0 : i32
    %83 = tpu.memref_slice %arg7[%c2_i32_41, %c0_i32_42] : memref<8x128xf32, #tpu.memory_space<vmem>> -> memref<1x128xf32, #tpu.memory_space<vmem>>
    %84 = tpu.memref_slice %arg8[%c2_i32_39] : memref<8x!tpu.dma_semaphore, #tpu.memory_space<semaphore_mem>> -> memref<1x!tpu.dma_semaphore, #tpu.memory_space<semaphore_mem>>
    %85 = tpu.memref_squeeze %84 : memref<1x!tpu.dma_semaphore, #tpu.memory_space<semaphore_mem>> -> memref<!tpu.dma_semaphore, #tpu.memory_space<semaphore_mem>>
    tpu.wait_dma2 semaphore(%85 : memref<!tpu.dma_semaphore, #tpu.memory_space<semaphore_mem>>) src(%82 : memref<1x128xf32, #tpu.memory_space<any>>) dst(%83 : memref<1x128xf32, #tpu.memory_space<vmem>>)
    %c3_i32_43 = arith.constant 3 : i32
    %c0_i32_44 = arith.constant 0 : i32
    %86 = tpu.memref_slice %arg4[%c0_i32_44, %1] : memref<512x128xf32, #tpu.memory_space<any>> -> memref<1x128xf32, #tpu.memory_space<any>>
    %c3_i32_45 = arith.constant 3 : i32
    %c0_i32_46 = arith.constant 0 : i32
    %87 = tpu.memref_slice %arg7[%c3_i32_45, %c0_i32_46] : memref<8x128xf32, #tpu.memory_space<vmem>> -> memref<1x128xf32, #tpu.memory_space<vmem>>
    %88 = tpu.memref_slice %arg8[%c3_i32_43] : memref<8x!tpu.dma_semaphore, #tpu.memory_space<semaphore_mem>> -> memref<1x!tpu.dma_semaphore, #tpu.memory_space<semaphore_mem>>
    %89 = tpu.memref_squeeze %88 : memref<1x!tpu.dma_semaphore, #tpu.memory_space<semaphore_mem>> -> memref<!tpu.dma_semaphore, #tpu.memory_space<semaphore_mem>>
    tpu.wait_dma2 semaphore(%89 : memref<!tpu.dma_semaphore, #tpu.memory_space<semaphore_mem>>) src(%86 : memref<1x128xf32, #tpu.memory_space<any>>) dst(%87 : memref<1x128xf32, #tpu.memory_space<vmem>>)
    %c4_i32_47 = arith.constant 4 : i32
    %c0_i32_48 = arith.constant 0 : i32
    %90 = tpu.memref_slice %arg4[%c0_i32_48, %1] : memref<512x128xf32, #tpu.memory_space<any>> -> memref<1x128xf32, #tpu.memory_space<any>>
    %c4_i32_49 = arith.constant 4 : i32
    %c0_i32_50 = arith.constant 0 : i32
    %91 = tpu.memref_slice %arg7[%c4_i32_49, %c0_i32_50] : memref<8x128xf32, #tpu.memory_space<vmem>> -> memref<1x128xf32, #tpu.memory_space<vmem>>
    %92 = tpu.memref_slice %arg8[%c4_i32_47] : memref<8x!tpu.dma_semaphore, #tpu.memory_space<semaphore_mem>> -> memref<1x!tpu.dma_semaphore, #tpu.memory_space<semaphore_mem>>
    %93 = tpu.memref_squeeze %92 : memref<1x!tpu.dma_semaphore, #tpu.memory_space<semaphore_mem>> -> memref<!tpu.dma_semaphore, #tpu.memory_space<semaphore_mem>>
    tpu.wait_dma2 semaphore(%93 : memref<!tpu.dma_semaphore, #tpu.memory_space<semaphore_mem>>) src(%90 : memref<1x128xf32, #tpu.memory_space<any>>) dst(%91 : memref<1x128xf32, #tpu.memory_space<vmem>>)
    %c5_i32_51 = arith.constant 5 : i32
    %c0_i32_52 = arith.constant 0 : i32
    %94 = tpu.memref_slice %arg4[%c0_i32_52, %1] : memref<512x128xf32, #tpu.memory_space<any>> -> memref<1x128xf32, #tpu.memory_space<any>>
    %c5_i32_53 = arith.constant 5 : i32
    %c0_i32_54 = arith.constant 0 : i32
    %95 = tpu.memref_slice %arg7[%c5_i32_53, %c0_i32_54] : memref<8x128xf32, #tpu.memory_space<vmem>> -> memref<1x128xf32, #tpu.memory_space<vmem>>
    %96 = tpu.memref_slice %arg8[%c5_i32_51] : memref<8x!tpu.dma_semaphore, #tpu.memory_space<semaphore_mem>> -> memref<1x!tpu.dma_semaphore, #tpu.memory_space<semaphore_mem>>
    %97 = tpu.memref_squeeze %96 : memref<1x!tpu.dma_semaphore, #tpu.memory_space<semaphore_mem>> -> memref<!tpu.dma_semaphore, #tpu.memory_space<semaphore_mem>>
    tpu.wait_dma2 semaphore(%97 : memref<!tpu.dma_semaphore, #tpu.memory_space<semaphore_mem>>) src(%94 : memref<1x128xf32, #tpu.memory_space<any>>) dst(%95 : memref<1x128xf32, #tpu.memory_space<vmem>>)
    %c6_i32_55 = arith.constant 6 : i32
    %c0_i32_56 = arith.constant 0 : i32
    %98 = tpu.memref_slice %arg4[%c0_i32_56, %1] : memref<512x128xf32, #tpu.memory_space<any>> -> memref<1x128xf32, #tpu.memory_space<any>>
    %c6_i32_57 = arith.constant 6 : i32
    %c0_i32_58 = arith.constant 0 : i32
    %99 = tpu.memref_slice %arg7[%c6_i32_57, %c0_i32_58] : memref<8x128xf32, #tpu.memory_space<vmem>> -> memref<1x128xf32, #tpu.memory_space<vmem>>
    %100 = tpu.memref_slice %arg8[%c6_i32_55] : memref<8x!tpu.dma_semaphore, #tpu.memory_space<semaphore_mem>> -> memref<1x!tpu.dma_semaphore, #tpu.memory_space<semaphore_mem>>
    %101 = tpu.memref_squeeze %100 : memref<1x!tpu.dma_semaphore, #tpu.memory_space<semaphore_mem>> -> memref<!tpu.dma_semaphore, #tpu.memory_space<semaphore_mem>>
    tpu.wait_dma2 semaphore(%101 : memref<!tpu.dma_semaphore, #tpu.memory_space<semaphore_mem>>) src(%98 : memref<1x128xf32, #tpu.memory_space<any>>) dst(%99 : memref<1x128xf32, #tpu.memory_space<vmem>>)
    %c7_i32_59 = arith.constant 7 : i32
    %c0_i32_60 = arith.constant 0 : i32
    %102 = tpu.memref_slice %arg4[%c0_i32_60, %1] : memref<512x128xf32, #tpu.memory_space<any>> -> memref<1x128xf32, #tpu.memory_space<any>>
    %c7_i32_61 = arith.constant 7 : i32
    %c0_i32_62 = arith.constant 0 : i32
    %103 = tpu.memref_slice %arg7[%c7_i32_61, %c0_i32_62] : memref<8x128xf32, #tpu.memory_space<vmem>> -> memref<1x128xf32, #tpu.memory_space<vmem>>
    %104 = tpu.memref_slice %arg8[%c7_i32_59] : memref<8x!tpu.dma_semaphore, #tpu.memory_space<semaphore_mem>> -> memref<1x!tpu.dma_semaphore, #tpu.memory_space<semaphore_mem>>
    %105 = tpu.memref_squeeze %104 : memref<1x!tpu.dma_semaphore, #tpu.memory_space<semaphore_mem>> -> memref<!tpu.dma_semaphore, #tpu.memory_space<semaphore_mem>>
    tpu.wait_dma2 semaphore(%105 : memref<!tpu.dma_semaphore, #tpu.memory_space<semaphore_mem>>) src(%102 : memref<1x128xf32, #tpu.memory_space<any>>) dst(%103 : memref<1x128xf32, #tpu.memory_space<vmem>>)
    %c0 = arith.constant 0 : index
    %c0_63 = arith.constant 0 : index
    %106 = vector.load %arg7[%c0, %c0_63] : memref<8x128xf32, #tpu.memory_space<vmem>>, vector<8x128xf32>
    %c0_64 = arith.constant 0 : index
    %c0_65 = arith.constant 0 : index
    %107 = vector.load %arg5[%c0_64, %c0_65] : memref<8x128xf32, #tpu.memory_space<vmem>>, vector<8x128xf32>
    %108 = arith.addf %106, %107 : vector<8x128xf32>
    %c0_66 = arith.constant 0 : index
    %c0_67 = arith.constant 0 : index
    %c0_68 = arith.constant 0 : index
    %109 = vector.load %arg6[%c0_66, %c0_67, %c0_68] : memref<1x8x128xf32, #tpu.memory_space<vmem>>, vector<1x8x128xf32>
    %110 = vector.shape_cast %109 : vector<1x8x128xf32> to vector<8x128xf32>
    %111 = vector.shape_cast %108 : vector<8x128xf32> to vector<1x8x128xf32>
    tpu.vector_store %arg6[%c0_66, %c0_67, %c0_68], %111 {strides = array<i32>} : memref<1x8x128xf32, #tpu.memory_space<vmem>>, vector<1x8x128xf32>,
    return
  }
  func.func @transform_1(%arg0: i32, %arg1: i32, %arg2: i32, %arg3: memref<2x8xi32, #tpu.memory_space<smem>>) -> (i32, i32) {
    %c0_i32 = arith.constant 0 : i32
    return %arg1, %arg2 : i32, i32
  }
  func.func @transform_2(%arg0: i32, %arg1: i32, %arg2: i32, %arg3: memref<2x8xi32, #tpu.memory_space<smem>>) -> (i32, i32, i32) {
    %c0_i32 = arith.constant 0 : i32
    return %arg0, %arg1, %arg2 : i32, i32, i32
  }
}

</mosaic_0001>

<llo_original>
// kernel: tpu_custom_call.1
$region0: #{tpu_custom_call.1}
  #allocation0 [shape = 'u32[]', space=smem, size = 0x4, offset = 0x4, fixed_abs, tag = 'smem constant byte address 0x4 - core index']
  #allocation1 [shape = 'u32[144,128]{1,0:T(1,128)}', space=vmem, size = 0x12000, scoped, tag = 'internal scratch']
  #allocation2 [shape = 'f32[8,128]{1,0:T(8,128)}', space=vmem, size = 0x1000, scoped, tag = 'scratch operand']
  #allocation3 [shape = 's32[8]{0}', space=sflag, size = 0x20, scoped, tag = 'scratch operand']
  #allocation4 [shape = 's32[1]{0}', space=sflag, size = 0x4, scoped, tag = 'scoped memory for tpu_custom_call.1']
  #allocation5 [shape = 'u8[1024]{0}', space=smem, size = 0x400, scoped, tag = 'prefetched SMEM operand 0']
  #allocation10 [shape = 's32[]', space=sflag, size = 0x4, offset = 0, fixed_abs, tag = 'sflag constant byte address 0x0 - dummy sync flag']
  #allocation11 [shape = 's32[]', space=sflag, size = 0x4, offset = 0, fixed_abs, tag = 'sflag constant byte address 0x0 - dummy sync flag']
  #allocation12 [shape = 'u32[]', space=smem, size = 0x4, offset = 0x44, fixed_abs, tag = 'smem constant byte address 0x44 - assertion arg 0']
  #allocation13 [shape = 'u32[]', space=smem, size = 0x4, offset = 0x48, fixed_abs, tag = 'smem constant byte address 0x48 - assertion arg 1']
  #allocation14 [shape = 's32[]', space=sflag, size = 0x4, offset = 0, fixed_abs, tag = 'sflag constant byte address 0x0 - dummy sync flag']
  #allocation15 [shape = 's32[]', space=sflag, size = 0x4, offset = 0, fixed_abs, tag = 'sflag constant byte address 0x0 - dummy sync flag']
  #allocation16 [shape = 's32[]', space=sflag, size = 0x4, offset = 0, fixed_abs, tag = 'sflag constant byte address 0x0 - dummy sync flag']
  #allocation17 [shape = 's32[]', space=sflag, size = 0x4, offset = 0, fixed_abs, tag = 'sflag constant byte address 0x0 - dummy sync flag']
  #allocation18 [shape = 's32[]', space=sflag, size = 0x4, offset = 0, fixed_abs, tag = 'sflag constant byte address 0x0 - dummy sync flag']
  #allocation19 [shape = 's32[]', space=sflag, size = 0x4, offset = 0, fixed_abs, tag = 'sflag constant byte address 0x0 - dummy sync flag']
  #allocation20 [shape = 's32[]', space=sflag, size = 0x4, offset = 0, fixed_abs, tag = 'sflag constant byte address 0x0 - dummy sync flag']
  #allocation21 [shape = 's32[]', space=sflag, size = 0x4, offset = 0, fixed_abs, tag = 'sflag constant byte address 0x0 - dummy sync flag']
  #allocation22 [shape = 's32[]', space=sflag, size = 0x4, offset = 0, fixed_abs, tag = 'sflag constant byte address 0x0 - dummy sync flag']
  #allocation23 [shape = 's32[]', space=sflag, size = 0x4, offset = 0, fixed_abs, tag = 'sflag constant byte address 0x0 - dummy sync flag']
  #allocation24 [shape = 's32[]', space=sflag, size = 0x4, offset = 0, fixed_abs, tag = 'sflag constant byte address 0x0 - dummy sync flag']
  #allocation25 [shape = 's32[]', space=sflag, size = 0x4, offset = 0, fixed_abs, tag = 'sflag constant byte address 0x0 - dummy sync flag']
  #allocation26 [shape = 's32[]', space=sflag, size = 0x4, offset = 0, fixed_abs, tag = 'sflag constant byte address 0x0 - dummy sync flag']
  #allocation27 [shape = 's32[]', space=sflag, size = 0x4, offset = 0, fixed_abs, tag = 'sflag constant byte address 0x0 - dummy sync flag']
  %s0 = inlined_call_operand.hbm [shape: s32[2,8], index: 0, kind: input, shape index: {}]
  %s1 = inlined_call_operand.hbm [shape: f32[512,128], index: 1, kind: input, shape index: {}]
  %s2 = inlined_call_operand.hbm [shape: f32[8,128], index: 2, kind: input, shape index: {}]
  %s3 = inlined_call_operand.hbm [shape: f32[2,8,128], index: 3, kind: output, shape index: {}]
  %s4 = sld [smem:[#allocation0]]
  $region73: #{tpu_custom_call.1} parent=0
    _
  %s6 = ssub.s32 1, %s4
  %s7 = scalar_select 0, %s6, %s4
  %9 = dma.hbm_to_smem %s0, 32, [#allocation5], [#allocation4]
  %10 = dma.done [#allocation4], 32
  %11 = sfence
  $region1: #{tpu_custom_call.1} parent=0
    #allocation6 [shape = 'u8[4096]{0}', space=vmem, size = 0x1000, scoped, tag = 'input window, operand 2, single buffered']
    #allocation7 [shape = 's32[2]{0}', space=sflag, size = 0x8, scoped, tag = 'scoped memory for tpu_custom_call.1']
    #allocation8 [shape = 's32[2]{0}', space=sflag, size = 0x8, scoped, tag = 'scoped memory for tpu_custom_call.1']
    #allocation9 [shape = 'u8[8192]{0}', space=vmem, size = 0x2000, scoped, tag = 'output window, operand 0']
    %12 = vsyncpa [#allocation7], 0
    %13 = vsyncpa [#allocation8], 0
    %s14 = scalar_lea.sflag [#allocation8], 1
    %15 = vsyncpa %s14, 0
    loop: start=0, step=1, limit=4
    $region2: #{tpu_custom_call.1} parent=1 // loop_pre_header
      _
    $region3: #{tpu_custom_call.1} parent=1 // loop_header
      %s17 = sphi 0, %s21
      %p18 = scmp.ge.s32.totalorder %s17, 4
      %s24 = sphi 0, %s43
      %s25 = sphi 0, %s39
      %s26 = sphi 0, %s35
      %s27 = sphi 0, %s24
      %s28 = sphi 0, %s25
      %s29 = sphi 0, %s26
      %s30 = sphi 0, %s27
      %s31 = sphi 0, %s28
      %s32 = sphi 0, %s29
      %s48 = sphi 0, %s50
      %s51 = sphi 0, %s48
      %s52 = sphi 0, %s51
      %s68 = sphi 0, %s52
      %s78 = sphi 0, %s80
      %s81 = sphi 0, %s78
      %s82 = sphi 0, %s81
      %s98 = sphi 0, %s82
    $region4: #{tpu_custom_call.1} parent=1 // loop_header_branch
      %20 = sbr.rel (%p18) target = $region8
    $region5: #{tpu_custom_call.1} parent=1 // loop_body
      %s22 = ssub.s32 %s17, 1
      %s23 = ssub.s32 %s17, 2
      %s33 = sadd.s32 1, %s26
      %p34 = scmp.ge.s32.totalorder %s33, 1
      %s35 = scalar_select %p34, 0, %s33
      %s36 = sadd.s32 1, %s25
      %s37 = scalar_select %p34, %s36, %s25
      %p38 = scmp.ge.s32.totalorder %s37, 1
      %s39 = scalar_select %p38, 0, %s37
      %s40 = sadd.s32 1, %s24
      %s41 = scalar_select %p38, %s40, %s24
      %p42 = scmp.ge.s32.totalorder %s41, 2
      %s43 = scalar_select %p42, 0, %s41
      %s44 = ssub.s32 %s25, %s39
      %s45 = ssub.s32 %s26, %s35
      %s46 = sor.u32 %s44, %s45
      %p47 = scmp.eq.s32.totalorder %s46, 0
      %s49 = sadd.s32 %s48, 1
      %s50 = scalar_select %p47, %s48, %s49
      %p53 = pneg %p47
      %p54 = scmp.eq.s32.totalorder %s17, 1
      %p55 = por %p53, %p54
      %p56 = scmp.ne.s32.totalorder %s48, %s51
      %p57 = scmp.eq.s32.totalorder %s17, 0
      %p58 = por %p56, %p57
      %p59 = scmp.ne.s32.totalorder %s48, %s51
      %p60 = scmp.eq.s32.totalorder %s22, 1
      %p61 = por %p59, %p60
      %p62 = scmp.ne.s32.totalorder %s51, %s52
      %p63 = scmp.eq.s32.totalorder %s22, 0
      %p64 = por %p62, %p63
      %p65 = scmp.ne.s32.totalorder %s51, %s52
      %p66 = scmp.eq.s32.totalorder %s23, 1
      %p67 = por %p65, %p66
      %p69 = scmp.ne.s32.totalorder %s52, %s68
      %p70 = scmp.eq.s32.totalorder %s23, 0
      %p71 = por %p69, %p70
      %s72 = ssub.s32 %s24, %s43
      %s73 = ssub.s32 %s25, %s39
      %s74 = sor.u32 %s72, %s73
      %s75 = ssub.s32 %s26, %s35
      %s76 = sor.u32 %s74, %s75
      %p77 = scmp.eq.s32.totalorder %s76, 0
      %s79 = sadd.s32 %s78, 1
      %s80 = scalar_select %p77, %s78, %s79
      %p83 = pneg %p77
      %p84 = scmp.eq.s32.totalorder %s17, 1
      %p85 = por %p83, %p84
      %p86 = scmp.ne.s32.totalorder %s78, %s81
      %p87 = scmp.eq.s32.totalorder %s17, 0
      %p88 = por %p86, %p87
      %p89 = scmp.ne.s32.totalorder %s78, %s81
      %p90 = scmp.eq.s32.totalorder %s22, 1
      %p91 = por %p89, %p90
      %p92 = scmp.ne.s32.totalorder %s81, %s82
      %p93 = scmp.eq.s32.totalorder %s22, 0
      %p94 = por %p92, %p93
      %p95 = scmp.ne.s32.totalorder %s81, %s82
      %p96 = scmp.eq.s32.totalorder %s23, 1
      %p97 = por %p95, %p96
      %p99 = scmp.ne.s32.totalorder %s82, %s98
      %p100 = scmp.eq.s32.totalorder %s23, 0
      %p101 = por %p99, %p100
      %p102 = scmp.le.s32.totalorder 1, %s17
      %p103 = scmp.lt.s32.totalorder %s17, 3
      %p104 = pnand %p102, %p103
      %p105 = pneg %p104
      // Predicated region
      $region9: #{tpu_custom_call.1} parent=5 // pred_check
        _
      $region10: #{tpu_custom_call.1} parent=5 // pred_check_branch
        %107 = sbr.rel (%p104) target = $region12
      $region11: #{tpu_custom_call.1} parent=5 // pred_region
        %s108 = ssub.s32 %s17, 1
        // Predicated region
        $region13: #{tpu_custom_call.1} parent=11 // pred_check
          %p109 = pneg %p64
        $region14: #{tpu_custom_call.1} parent=11 // pred_check_branch
          %111 = sbr.rel (%p109) target = $region16
        $region15: #{tpu_custom_call.1} parent=11 // pred_region
          %s113 = ssub.s32 128, 128
          %114 = vsyncadd [#allocation7], %s113
          %s115 = sadd.s32 %s29, %s28
          %s116 = smul.addr %s115, 128
          %s117 = scalar_lea.hbm %s2, %s116
          %s119 = sshll.u32 [#allocation6], 4
          %s120 = int_to_ptr.vmem [resolvable:$true] %s119
          %122 = dma.hbm_to_vmem [thread:$0]  %s117, 128, %s120, [#allocation7]
        $region16: #{tpu_custom_call.1} parent=11 // pred_fallthru
          _
      $region12: #{tpu_custom_call.1} parent=5 // pred_fallthru
        _
      %p123 = scmp.lt.s32.totalorder %s17, 2
      // Predicated region
      $region17: #{tpu_custom_call.1} parent=5 // pred_check
        %p124 = pneg %p123
      $region18: #{tpu_custom_call.1} parent=5 // pred_check_branch
        %126 = sbr.rel (%p124) target = $region20
      $region19: #{tpu_custom_call.1} parent=5 // pred_region
        _
      $region20: #{tpu_custom_call.1} parent=5 // pred_fallthru
        _
      %p127 = scmp.le.s32.totalorder 1, %s17
      %p128 = scmp.lt.s32.totalorder %s17, 3
      %p129 = pnand %p127, %p128
      %p130 = pneg %p129
      // Predicated region
      $region21: #{tpu_custom_call.1} parent=5 // pred_check
        _
      $region22: #{tpu_custom_call.1} parent=5 // pred_check_branch
        %132 = sbr.rel (%p129) target = $region24
      $region23: #{tpu_custom_call.1} parent=5 // pred_region
        %s133 = ssub.s32 %s17, 1
        // Predicated region
        $region25: #{tpu_custom_call.1} parent=23 // pred_check
          %p134 = pneg %p64
        $region26: #{tpu_custom_call.1} parent=23 // pred_check_branch
          %136 = sbr.rel (%p134) target = $region28
        $region27: #{tpu_custom_call.1} parent=23 // pred_region
          %137 = dma.done [#allocation7], 128
        $region28: #{tpu_custom_call.1} parent=23 // pred_fallthru
          _
        %p138 = pneg %p64
        %p139 = pneg %p61
        %p140 = pneg %p94
        %p141 = pneg %p91
        %s142 = sand.u32 %s81, 1
        %s143 = scalar_lea.sflag [#allocation8], %s142
        %s144 = sand.u32 %s81, 1
        %s145 = smul.addr %s144, 8
        %s146 = scalar_lea.vmem [#allocation9], %s145
        %s147 = smul.u32 %s29, 128
        %s148 = smul.u32 %s28, 8
        %s149 = sshra.s32 %s148, 7
        %s150 = sand.u32 %s148, 127
        %s151 = sadd.s32 %s149, %s27
        %s152 = smul.u32 %s151, 128
        %s153 = sshra.s32 %s148, 7
        %s154 = sand.u32 %s148, 127
        %s155 = sadd.s32 %s152, %s154
        %s156 = sld [smem:[#allocation5 + %s155]]
        %s157 = sshra.s32 %s147, 7
        %s158 = sand.u32 %s147, 127
        %s159 = sadd.s32 %s157, %s156
        %s160 = smul.addr %s159, 16
        %s161 = scalar_lea.hbm %s1, %s160
        // Predicated region
        $region29: #{tpu_custom_call.1} parent=23 // pred_check
          _
        $region30: #{tpu_custom_call.1} parent=23 // pred_check_branch
          %163 = sbr.rel target = $region32
        $region31: #{tpu_custom_call.1} parent=23 // pred_region
          %164 = sst [smem:[#allocation12]] [#allocation11]
          %165 = sst [smem:[#allocation13]] [#allocation10]
        $region32: #{tpu_custom_call.1} parent=23 // pred_fallthru
          _
        %167 = shalt.err (0)
        %s169 = sshll.u32 [#allocation2], 4
        %s170 = int_to_ptr.vmem [resolvable:$true] %s169
        %172 = dma.hbm_to_vmem [thread:$0]  %s161, 16, %s170, [#allocation3]
        %s173 = sadd.s32 %s148, 1
        %s174 = sshra.s32 %s173, 7
        %s175 = sand.u32 %s173, 127
        %s176 = sadd.s32 %s174, %s27
        %s177 = smul.u32 %s176, 128
        %s178 = sshra.s32 %s173, 7
        %s179 = sand.u32 %s173, 127
        %s180 = sadd.s32 %s177, %s179
        %s181 = sld [smem:[#allocation5 + %s180]]
        %s182 = sadd.s32 %s157, %s181
        %s183 = smul.addr %s182, 16
        %s184 = scalar_lea.hbm %s1, %s183
        %s185 = scalar_lea.vmem [#allocation2], 1
        %s186 = scalar_lea.sflag [#allocation3], 1
        // Predicated region
        $region33: #{tpu_custom_call.1} parent=23 // pred_check
          _
        $region34: #{tpu_custom_call.1} parent=23 // pred_check_branch
          %188 = sbr.rel target = $region36
        $region35: #{tpu_custom_call.1} parent=23 // pred_region
          %189 = sst [smem:[#allocation12]] [#allocation15]
          %190 = sst [smem:[#allocation13]] [#allocation14]
        $region36: #{tpu_custom_call.1} parent=23 // pred_fallthru
          _
        %192 = shalt.err (0)
        %s194 = sshll.u32 %s185, 4
        %s195 = int_to_ptr.vmem [resolvable:$true] %s194
        %197 = dma.hbm_to_vmem [thread:$0]  %s184, 16, %s195, %s186
        %s198 = sadd.s32 %s148, 2
        %s199 = sshra.s32 %s198, 7
        %s200 = sand.u32 %s198, 127
        %s201 = sadd.s32 %s199, %s27
        %s202 = smul.u32 %s201, 128
        %s203 = sshra.s32 %s198, 7
        %s204 = sand.u32 %s198, 127
        %s205 = sadd.s32 %s202, %s204
        %s206 = sld [smem:[#allocation5 + %s205]]
        %s207 = sadd.s32 %s157, %s206
        %s208 = smul.addr %s207, 16
        %s209 = scalar_lea.hbm %s1, %s208
        %s210 = scalar_lea.vmem [#allocation2], 2
        %s211 = scalar_lea.sflag [#allocation3], 2
        // Predicated region
        $region37: #{tpu_custom_call.1} parent=23 // pred_check
          _
        $region38: #{tpu_custom_call.1} parent=23 // pred_check_branch
          %213 = sbr.rel target = $region40
        $region39: #{tpu_custom_call.1} parent=23 // pred_region
          %214 = sst [smem:[#allocation12]] [#allocation17]
          %215 = sst [smem:[#allocation13]] [#allocation16]
        $region40: #{tpu_custom_call.1} parent=23 // pred_fallthru
          _
        %217 = shalt.err (0)
        %s219 = sshll.u32 %s210, 4
        %s220 = int_to_ptr.vmem [resolvable:$true] %s219
        %222 = dma.hbm_to_vmem [thread:$0]  %s209, 16, %s220, %s211
        %s223 = sadd.s32 %s148, 3
        %s224 = sshra.s32 %s223, 7
        %s225 = sand.u32 %s223, 127
        %s226 = sadd.s32 %s224, %s27
        %s227 = smul.u32 %s226, 128
        %s228 = sshra.s32 %s223, 7
        %s229 = sand.u32 %s223, 127
        %s230 = sadd.s32 %s227, %s229
        %s231 = sld [smem:[#allocation5 + %s230]]
        %s232 = sadd.s32 %s157, %s231
        %s233 = smul.addr %s232, 16
        %s234 = scalar_lea.hbm %s1, %s233
        %s235 = scalar_lea.vmem [#allocation2], 3
        %s236 = scalar_lea.sflag [#allocation3], 3
        // Predicated region
        $region41: #{tpu_custom_call.1} parent=23 // pred_check
          _
        $region42: #{tpu_custom_call.1} parent=23 // pred_check_branch
          %238 = sbr.rel target = $region44
        $region43: #{tpu_custom_call.1} parent=23 // pred_region
          %239 = sst [smem:[#allocation12]] [#allocation19]
          %240 = sst [smem:[#allocation13]] [#allocation18]
        $region44: #{tpu_custom_call.1} parent=23 // pred_fallthru
          _
        %242 = shalt.err (0)
        %s244 = sshll.u32 %s235, 4
        %s245 = int_to_ptr.vmem [resolvable:$true] %s244
        %247 = dma.hbm_to_vmem [thread:$0]  %s234, 16, %s245, %s236
        %s248 = sadd.s32 %s148, 4
        %s249 = sshra.s32 %s248, 7
        %s250 = sand.u32 %s248, 127
        %s251 = sadd.s32 %s249, %s27
        %s252 = smul.u32 %s251, 128
        %s253 = sshra.s32 %s248, 7
        %s254 = sand.u32 %s248, 127
        %s255 = sadd.s32 %s252, %s254
        %s256 = sld [smem:[#allocation5 + %s255]]
        %s257 = sadd.s32 %s157, %s256
        %s258 = smul.addr %s257, 16
        %s259 = scalar_lea.hbm %s1, %s258
        %s260 = scalar_lea.vmem [#allocation2], 4
        %s261 = scalar_lea.sflag [#allocation3], 4
        // Predicated region
        $region45: #{tpu_custom_call.1} parent=23 // pred_check
          _
        $region46: #{tpu_custom_call.1} parent=23 // pred_check_branch
          %263 = sbr.rel target = $region48
        $region47: #{tpu_custom_call.1} parent=23 // pred_region
          %264 = sst [smem:[#allocation12]] [#allocation21]
          %265 = sst [smem:[#allocation13]] [#allocation20]
        $region48: #{tpu_custom_call.1} parent=23 // pred_fallthru
          _
        %267 = shalt.err (0)
        %s269 = sshll.u32 %s260, 4
        %s270 = int_to_ptr.vmem [resolvable:$true] %s269
        %272 = dma.hbm_to_vmem [thread:$0]  %s259, 16, %s270, %s261
        %s273 = sadd.s32 %s148, 5
        %s274 = sshra.s32 %s273, 7
        %s275 = sand.u32 %s273, 127
        %s276 = sadd.s32 %s274, %s27
        %s277 = smul.u32 %s276, 128
        %s278 = sshra.s32 %s273, 7
        %s279 = sand.u32 %s273, 127
        %s280 = sadd.s32 %s277, %s279
        %s281 = sld [smem:[#allocation5 + %s280]]
        %s282 = sadd.s32 %s157, %s281
        %s283 = smul.addr %s282, 16
        %s284 = scalar_lea.hbm %s1, %s283
        %s285 = scalar_lea.vmem [#allocation2], 5
        %s286 = scalar_lea.sflag [#allocation3], 5
        // Predicated region
        $region49: #{tpu_custom_call.1} parent=23 // pred_check
          _
        $region50: #{tpu_custom_call.1} parent=23 // pred_check_branch
          %288 = sbr.rel target = $region52
        $region51: #{tpu_custom_call.1} parent=23 // pred_region
          %289 = sst [smem:[#allocation12]] [#allocation23]
          %290 = sst [smem:[#allocation13]] [#allocation22]
        $region52: #{tpu_custom_call.1} parent=23 // pred_fallthru
          _
        %292 = shalt.err (0)
        %s294 = sshll.u32 %s285, 4
        %s295 = int_to_ptr.vmem [resolvable:$true] %s294
        %297 = dma.hbm_to_vmem [thread:$0]  %s284, 16, %s295, %s286
        %s298 = sadd.s32 %s148, 6
        %s299 = sshra.s32 %s298, 7
        %s300 = sand.u32 %s298, 127
        %s301 = sadd.s32 %s299, %s27
        %s302 = smul.u32 %s301, 128
        %s303 = sshra.s32 %s298, 7
        %s304 = sand.u32 %s298, 127
        %s305 = sadd.s32 %s302, %s304
        %s306 = sld [smem:[#allocation5 + %s305]]
        %s307 = sadd.s32 %s157, %s306
        %s308 = smul.addr %s307, 16
        %s309 = scalar_lea.hbm %s1, %s308
        %s310 = scalar_lea.vmem [#allocation2], 6
        %s311 = scalar_lea.sflag [#allocation3], 6
        // Predicated region
        $region53: #{tpu_custom_call.1} parent=23 // pred_check
          _
        $region54: #{tpu_custom_call.1} parent=23 // pred_check_branch
          %313 = sbr.rel target = $region56
        $region55: #{tpu_custom_call.1} parent=23 // pred_region
          %314 = sst [smem:[#allocation12]] [#allocation25]
          %315 = sst [smem:[#allocation13]] [#allocation24]
        $region56: #{tpu_custom_call.1} parent=23 // pred_fallthru
          _
        %317 = shalt.err (0)
        %s319 = sshll.u32 %s310, 4
        %s320 = int_to_ptr.vmem [resolvable:$true] %s319
        %322 = dma.hbm_to_vmem [thread:$0]  %s309, 16, %s320, %s311
        %s323 = sadd.s32 %s148, 7
        %s324 = sshra.s32 %s323, 7
        %s325 = sand.u32 %s323, 127
        %s326 = sadd.s32 %s324, %s27
        %s327 = smul.u32 %s326, 128
        %s328 = sshra.s32 %s323, 7
        %s329 = sand.u32 %s323, 127
        %s330 = sadd.s32 %s327, %s329
        %s331 = sld [smem:[#allocation5 + %s330]]
        %s332 = sadd.s32 %s157, %s331
        %s333 = smul.addr %s332, 16
        %s334 = scalar_lea.hbm %s1, %s333
        %s335 = scalar_lea.vmem [#allocation2], 7
        %s336 = scalar_lea.sflag [#allocation3], 7
        // Predicated region
        $region57: #{tpu_custom_call.1} parent=23 // pred_check
          _
        $region58: #{tpu_custom_call.1} parent=23 // pred_check_branch
          %338 = sbr.rel target = $region60
        $region59: #{tpu_custom_call.1} parent=23 // pred_region
          %339 = sst [smem:[#allocation12]] [#allocation27]
          %340 = sst [smem:[#allocation13]] [#allocation26]
        $region60: #{tpu_custom_call.1} parent=23 // pred_fallthru
          _
        %342 = shalt.err (0)
        %s344 = sshll.u32 %s335, 4
        %s345 = int_to_ptr.vmem [resolvable:$true] %s344
        %347 = dma.hbm_to_vmem [thread:$0]  %s334, 16, %s345, %s336
        %s348 = smul.u32 1, 1
        %s349 = sshll.u32 %s348, 4
        %350 = dma.done [#allocation3], %s349
        %s351 = sshll.u32 %s348, 4
        %352 = dma.done %s186, %s351
        %s353 = sshll.u32 %s348, 4
        %354 = dma.done %s211, %s353
        %s355 = sshll.u32 %s348, 4
        %356 = dma.done %s236, %s355
        %s357 = sshll.u32 %s348, 4
        %358 = dma.done %s261, %s357
        %s359 = sshll.u32 %s348, 4
        %360 = dma.done %s286, %s359
        %s361 = sshll.u32 %s348, 4
        %362 = dma.done %s311, %s361
        %s363 = sshll.u32 %s348, 4
        %364 = dma.done %s336, %s363
        %v365 = vld [vmem:[#allocation2] sm:$0xff]
        %v366 = vld [vmem:[#allocation6] sm:$0xff]
        %v367 = vadd.f32 %v365, %v366
        %368 = vst [vmem:[%s146] sm:$0xff] %v367
        %s369 = sand.u32 %s81, 1
        %s370 = scalar_lea.sflag [#allocation8], %s369
        %s371 = sand.u32 %s81, 1
        %s372 = smul.addr %s371, 8
        %s373 = scalar_lea.vmem [#allocation9], %s372
        // Predicated region
        $region61: #{tpu_custom_call.1} parent=23 // pred_check
          %p374 = pneg %p91
        $region62: #{tpu_custom_call.1} parent=23 // pred_check_branch
          %376 = sbr.rel (%p374) target = $region64
        $region63: #{tpu_custom_call.1} parent=23 // pred_region
          %s378 = ssub.s32 128, 128
          %379 = vsyncadd %s370, %s378
          %s380 = sadd.s32 %s29, %s28
          %s381 = sadd.s32 %s380, %s27
          %s382 = smul.addr %s381, 128
          %s383 = scalar_lea.hbm %s3, %s382
          %s385 = sshll.u32 %s373, 4
          %s386 = int_to_ptr.vmem [resolvable:$true] %s385
          %388 = dma.vmem_to_hbm [thread:$0]  %s386, 128, %s383, %s370
        $region64: #{tpu_custom_call.1} parent=23 // pred_fallthru
          _
      $region24: #{tpu_custom_call.1} parent=5 // pred_fallthru
        _
      %p389 = scmp.le.s32.totalorder 2, %s17
      // Predicated region
      $region65: #{tpu_custom_call.1} parent=5 // pred_check
        %p390 = pneg %p389
      $region66: #{tpu_custom_call.1} parent=5 // pred_check_branch
        %392 = sbr.rel (%p390) target = $region68
      $region67: #{tpu_custom_call.1} parent=5 // pred_region
        %s393 = ssub.s32 %s17, 2
        // Predicated region
        $region69: #{tpu_custom_call.1} parent=67 // pred_check
          %p394 = pneg %p97
        $region70: #{tpu_custom_call.1} parent=67 // pred_check_branch
          %396 = sbr.rel (%p394) target = $region72
        $region71: #{tpu_custom_call.1} parent=67 // pred_region
          %s397 = sand.u32 %s82, 1
          %s398 = scalar_lea.sflag [#allocation8], %s397
          %s399 = sand.u32 %s82, 1
          %s400 = smul.addr %s399, 8
          %s401 = scalar_lea.vmem [#allocation9], %s400
          %402 = dma.done %s398, 128
        $region72: #{tpu_custom_call.1} parent=67 // pred_fallthru
          _
      $region68: #{tpu_custom_call.1} parent=5 // pred_fallthru
        _
    $region6: #{tpu_custom_call.1} parent=1 // loop_footer
      %s21 = sadd.s32 1, %s17
    $region7: #{tpu_custom_call.1} parent=1 // loop_footer_branch
      %16 = sbr.rel target = $region3
    $region8: #{tpu_custom_call.1} parent=1 // loop_exit
      _
    %403 = vsyncpa [#allocation7], 1
    %s404 = scalar_lea.sflag [#allocation7], 1
    %405 = vsyncpa %s404, 1
    %406 = vsyncpa [#allocation8], 1
    %s407 = scalar_lea.sflag [#allocation8], 1
    %408 = vsyncpa %s407, 1
  %409 = vsyncmov [#allocation3]
  %s410 = vpop.sfrf %409
  %p411 = scmp.eq.s32.totalorder %s410, 0
  %p412 = pneg %p411
  %414 = shalt.err (%p412)
  %s415 = scalar_lea.sflag [#allocation3], 1
  %416 = vsyncmov %s415
  %s417 = vpop.sfrf %416
  %p418 = scmp.eq.s32.totalorder %s417, 0
  %p419 = pneg %p418
  %421 = shalt.err (%p419)
  %s422 = scalar_lea.sflag [#allocation3], 2
  %423 = vsyncmov %s422
  %s424 = vpop.sfrf %423
  %p425 = scmp.eq.s32.totalorder %s424, 0
  %p426 = pneg %p425
  %428 = shalt.err (%p426)
  %s429 = scalar_lea.sflag [#allocation3], 3
  %430 = vsyncmov %s429
  %s431 = vpop.sfrf %430
  %p432 = scmp.eq.s32.totalorder %s431, 0
  %p433 = pneg %p432
  %435 = shalt.err (%p433)
  %s436 = scalar_lea.sflag [#allocation3], 4
  %437 = vsyncmov %s436
  %s438 = vpop.sfrf %437
  %p439 = scmp.eq.s32.totalorder %s438, 0
  %p440 = pneg %p439
  %442 = shalt.err (%p440)
  %s443 = scalar_lea.sflag [#allocation3], 5
  %444 = vsyncmov %s443
  %s445 = vpop.sfrf %444
  %p446 = scmp.eq.s32.totalorder %s445, 0
  %p447 = pneg %p446
  %449 = shalt.err (%p447)
  %s450 = scalar_lea.sflag [#allocation3], 6
  %451 = vsyncmov %s450
  %s452 = vpop.sfrf %451
  %p453 = scmp.eq.s32.totalorder %s452, 0
  %p454 = pneg %p453
  %456 = shalt.err (%p454)
  %s457 = scalar_lea.sflag [#allocation3], 7
  %458 = vsyncmov %s457
  %s459 = vpop.sfrf %458
  %p460 = scmp.eq.s32.totalorder %s459, 0
  %p461 = pneg %p460
  %463 = shalt.err (%p461)

</llo_original>
